<compile_context>
chip_gen: v6e
topology: v6e:2x2x1
jax: 0.10.0
libtpu: 0.0.40
codegen_flags: <defaults>
</compile_context>

<pallas_src>
import functools

import jax
import jax.numpy as jnp
from jax import lax
from jax.experimental import pallas as pl
from jax.experimental.pallas import tpu as pltpu

_BIG = 1.0e30  # sentinel squared-norm for padded points


def _round_up(x, m):
    return ((x + m - 1) // m) * m


def _hausdorff_kernel(x_ref, y_ref, out_ref,
                      colmin_ref, rowmin_ref, loss1_ref, loss2_ref,
                      *, n_x, n_y, nx_pad, ny_pad, t_x, t_y, strip):
    """One (batch, x-tile i, y-tile j) grid step.

    x_ref:  [1, t_x, K]   augmented rows    (coords, rx, 1, 0..)
    y_ref:  [1, K, t_y]   augmented columns (-2*coords; 1; ry; 0..), lane-dense
    out_ref:[1, 1, 1]     per-batch scalar, written on the last step only
    """
    it = pl.program_id(1)            # x (rows) tile index, outer reduction
    jt = pl.program_id(2)            # y (cols) tile index, inner reduction
    n_it = pl.num_programs(1)
    n_jt = pl.num_programs(2)

    y = y_ref[0]                     # [K, t_y] - stays in vregs (K=8)

    # ---- column-min partial for this y tile (min over all x rows) ----------
    col_view = colmin_ref.at[jt]     # [8, t_y]

    @pl.when(it == 0)
    def _():
        col_view[...] = jnp.full((8, t_y), jnp.inf, dtype=jnp.float32)

    cm = col_view[...]               # carried in vregs across the strip loop

    # ---- strip-wise fused matmul + min folds --------------------------------
    for s in range(t_x // strip):
        xs = x_ref[0, s * strip:(s + 1) * strip, :]          # [strip, K]
        # MXU emits P directly: rx + ry - 2<x, y> (affine terms folded in).
        ps = jnp.dot(xs, y, preferred_element_type=jnp.float32)  # [strip, t_y]

        # loss1 partial: fold strip rows into the 8-row sublane partial (VPU).
        for r in range(strip // 8):
            cm = jnp.minimum(cm, ps[r * 8:(r + 1) * 8, :])

        # loss2 partial: 128-lane partial min for this strip (VPU).
        rm = ps[:, 0:128]
        for c in range(1, t_y // 128):
            rm = jnp.minimum(rm, ps[:, c * 128:(c + 1) * 128])

        rslice = pl.ds(s * strip, strip)

        @pl.when(jt == 0)            # first y tile: store, no init burst
        def _():
            rowmin_ref[rslice, :] = rm

        @pl.when(jt > 0)             # later y tiles: running min
        def _():
            rowmin_ref[rslice, :] = jnp.minimum(rowmin_ref[rslice, :], rm)

    col_view[...] = cm

    # ---- loss1: this y tile's column-min completes on the last x tile -------
    @pl.when((it == n_it - 1) & (jt == 0))
    def _():
        loss1_ref[...] = jnp.full((1, 1), -jnp.inf, dtype=jnp.float32)

    @pl.when(it == n_it - 1)
    def _():
        col_min = jnp.min(cm, axis=0, keepdims=True)          # [1, t_y]
        if ny_pad != n_y:  # mask padded columns out of the max
            lanes = jt * t_y + lax.broadcasted_iota(jnp.int32, (1, t_y), 1)
            col_min = jnp.where(lanes < n_y, col_min, -jnp.inf)
        loss1_ref[...] = jnp.maximum(loss1_ref[...],
                                     jnp.max(col_min, axis=1, keepdims=True))

    # ---- loss2: this x tile's row-min completes on the last y tile ----------
    @pl.when((jt == n_jt - 1) & (it == 0))
    def _():
        loss2_ref[...] = jnp.full((1, 1), -jnp.inf, dtype=jnp.float32)

    @pl.when(jt == n_jt - 1)
    def _():
        rmf = rowmin_ref[...]                                 # [t_x, 128]
        row_min = jnp.min(rmf, axis=1, keepdims=True)         # [t_x, 1]
        if nx_pad != n_x:  # mask padded rows out of the max
            rows = it * t_x + lax.broadcasted_iota(jnp.int32, (t_x, 1), 0)
            row_min = jnp.where(rows < n_x, row_min, -jnp.inf)
        loss2_ref[...] = jnp.maximum(loss2_ref[...],
                                     jnp.max(row_min, axis=0, keepdims=True))

    # ---- final step for this batch element: emit (loss1 + loss2) / 2 --------
    @pl.when((it == n_it - 1) & (jt == n_jt - 1))
    def _():
        out_ref[0] = (loss1_ref[...] + loss2_ref[...]) * 0.5


def hausdorff_distance(preds, gts, *, tile_rows=256, tile_lanes=512):
    """JAX/Pallas equivalent of HausdorffDistance.forward."""
    # Mirror the torch branch: if preds is [B, 3, N1], put points on axis 1
    # and keep only xyz of gts.
    if preds.shape[1] == 3:
        preds = jnp.swapaxes(preds, 1, 2)
        gts = gts[:, :, :3]

    preds = jnp.asarray(preds, jnp.float32)
    gts = jnp.asarray(gts, jnp.float32)

    B, N1, D = preds.shape
    B2, N2, D2 = gts.shape
    assert B == B2 and D == D2, "shapes must match"
    assert tile_lanes % 128 == 0 and tile_rows % 64 == 0

    # Hausdorff is symmetric in (preds, gts): put the smaller point cloud on
    # the lane axis (inner / re-streamed / colmin-accumulated side).
    if N2 < N1:
        xpts, ypts, n_x, n_y = preds, gts, N1, N2
    else:
        xpts, ypts, n_x, n_y = gts, preds, N2, N1

    # ---- tiling --------------------------------------------------------------
    ny_pad = _round_up(n_y, 128)
    t_y = ny_pad if ny_pad <= tile_lanes else tile_lanes
    ny_pad = _round_up(n_y, t_y)

    nx_pad = _round_up(n_x, 64)
    t_x = nx_pad if nx_pad <= tile_rows else tile_rows
    nx_pad = _round_up(n_x, t_x)
    strip = min(64, t_x)

    ka = _round_up(D + 2, 8)

    # ---- augmented operands (fold rx, ry and the -2 scale into the matmul) --
    # x side [B, nx_pad, K]: columns = (coords, rx, 1, 0..); padded rows get
    # rx = +BIG so they never win a min over rows.
    xp = jnp.pad(xpts, ((0, 0), (0, nx_pad - n_x), (0, 0)))
    rx = jnp.sum(xp * xp, axis=-1)
    rx = jnp.where(jnp.arange(nx_pad)[None, :] < n_x, rx, _BIG)
    ones_x = jnp.ones((B, nx_pad, 1), jnp.float32)
    x_aug = jnp.concatenate([xp, rx[..., None], ones_x], axis=-1)
    if ka > D + 2:
        x_aug = jnp.pad(x_aug, ((0, 0), (0, 0), (0, ka - (D + 2))))

    # y side [B, K, ny_pad] (lane-dense): rows = (-2*coords; 1; ry; 0..);
    # padded columns get ry = +BIG so they never win a min over columns.
    yp = jnp.pad(ypts, ((0, 0), (0, ny_pad - n_y), (0, 0)))
    ry = jnp.sum(yp * yp, axis=-1)
    ry = jnp.where(jnp.arange(ny_pad)[None, :] < n_y, ry, _BIG)
    ones_y = jnp.ones((B, 1, ny_pad), jnp.float32)
    y_aug = jnp.concatenate([-2.0 * jnp.swapaxes(yp, 1, 2),
                             ones_y,
                             ry[:, None, :]], axis=1)
    if ka > D + 2:
        y_aug = jnp.pad(y_aug, ((0, 0), (0, ka - (D + 2)), (0, 0)))

    grid = (B, nx_pad // t_x, ny_pad // t_y)
    n_jt = grid[2]

    kernel = functools.partial(
        _hausdorff_kernel,
        n_x=n_x, n_y=n_y, nx_pad=nx_pad, ny_pad=ny_pad,
        t_x=t_x, t_y=t_y, strip=strip)

    out = pl.pallas_call(
        kernel,
        out_shape=jax.ShapeDtypeStruct((B, 1, 1), jnp.float32),
        grid=grid,
        in_specs=[
            pl.BlockSpec((1, t_x, ka), lambda b, i, j: (b, i, 0)),  # rows
            pl.BlockSpec((1, ka, t_y), lambda b, i, j: (b, 0, j)),  # cols
        ],
        out_specs=pl.BlockSpec((1, 1, 1), lambda b, i, j: (b, 0, 0)),
        scratch_shapes=[
            pltpu.VMEM((n_jt, 8, t_y), jnp.float32),   # colmin partials
            pltpu.VMEM((t_x, 128), jnp.float32),        # rowmin lane partial
            pltpu.VMEM((1, 1), jnp.float32),            # loss1 running max
            pltpu.VMEM((1, 1), jnp.float32),            # loss2 running max
        ],
        compiler_params=pltpu.CompilerParams(
            dimension_semantics=("parallel", "arbitrary", "arbitrary")),
    )(x_aug, y_aug)

    return out[:, 0, 0]                                            # [B]


def hausdorff_reference(preds, gts):
    """Pure-JAX reference replicating the PyTorch math exactly."""
    if preds.shape[1] == 3:
        preds = jnp.swapaxes(preds, 1, 2)
        gts = gts[:, :, :3]
    x, y = gts, preds                                              # x:[B,N2,3] y:[B,N1,3]
    zz = jnp.einsum("bnd,bmd->bnm", x, y)                          # [B, N2, N1]
    rx = jnp.sum(x * x, axis=-1)[:, :, None]                        # [B, N2, 1]
    ry = jnp.sum(y * y, axis=-1)[:, None, :]                        # [B, 1, N1]
    P = rx + ry - 2.0 * zz
    loss1 = jnp.max(jnp.min(P, axis=1), axis=1)
    loss2 = jnp.max(jnp.min(P, axis=2), axis=1)
    return (loss1 + loss2) / 2.0


if __name__ == "__main__":
    # HausdorffDistance has no learnable parameters; nothing to initialize.
    key = jax.random.PRNGKey(0)
    k1, k2, k3, k4 = jax.random.split(key, 4)

    # Small canonical shapes (single tile per batch element).
    B, N1, N2, D = 2, 8, 16, 3
    preds = jax.random.normal(k1, (B, N1, D), dtype=jnp.float32)
    gts = jax.random.normal(k2, (B, N2, D), dtype=jnp.float32)

    out = jax.block_until_ready(hausdorff_distance(preds, gts))
    ref = hausdorff_reference(preds, gts)
    assert out.shape == (B,), out.shape
    assert jnp.allclose(out, ref, rtol=1e-4, atol=1e-4), (out, ref)

    # Uneven point counts + small forced tiles to exercise the multi-tile
    # reduction, the symmetric role swap, padding sentinels and iota masks.
    N1b, N2b = 200, 150
    preds2 = jax.random.normal(k3, (B, N1b, D), dtype=jnp.float32)
    gts2 = jax.random.normal(k4, (B, N2b, D), dtype=jnp.float32)
    out2 = jax.block_until_ready(
        hausdorff_distance(preds2, gts2, tile_rows=64, tile_lanes=128))
    ref2 = hausdorff_reference(preds2, gts2)
    assert jnp.allclose(out2, ref2, rtol=1e-4, atol=1e-4), (out2, ref2)

    print("KERNEL_OK")
</pallas_src>

<mosaic_0001>
module attributes {stable_mosaic.version = 11 : i64} {
  func.func @_hausdorff_kernel(%arg0: i32, %arg1: i32, %arg2: i32, %arg3: memref<1x64x8xf32, #tpu.memory_space<vmem>>, %arg4: memref<1x8x128xf32, #tpu.memory_space<vmem>>, %arg5: memref<1x1x1xf32, #tpu.memory_space<vmem>>, %arg6: memref<1x8x128xf32, #tpu.memory_space<vmem>>, %arg7: memref<64x128xf32, #tpu.memory_space<vmem>>, %arg8: memref<1x1xf32, #tpu.memory_space<vmem>>, %arg9: memref<1x1xf32, #tpu.memory_space<vmem>>) attributes {dimension_semantics = [#tpu.dimension_semantics<parallel>, #tpu.dimension_semantics<arbitrary>, #tpu.dimension_semantics<arbitrary>], iteration_bounds = array<i64: 2, 1, 1>, scalar_prefetch = 0 : i64, scratch_operands = 4 : i64, tpu.core_type = #tpu.core_type<tc>, window_params = [{transform_indices = @transform_0, window_bounds = array<i64: 1, 64, 8>}, {transform_indices = @transform_1, window_bounds = array<i64: 1, 8, 128>}, {transform_indices = @transform_2, window_bounds = array<i64: 1, 1, 1>}]} {
    %c0 = arith.constant 0 : index
    %c0_0 = arith.constant 0 : index
    %c0_1 = arith.constant 0 : index
    %0 = vector.load %arg4[%c0, %c0_0, %c0_1] : memref<1x8x128xf32, #tpu.memory_space<vmem>>, vector<1x8x128xf32>
    %1 = vector.shape_cast %0 : vector<1x8x128xf32> to vector<8x128xf32>
    %c0_i32 = arith.constant 0 : i32
    %2 = arith.cmpi eq, %arg1, %c0_i32 : i32
    %3 = arith.extui %2 : i1 to i32
    %c0_i32_2 = arith.constant 0 : i32
    %4 = arith.cmpi ne, %3, %c0_i32_2 : i32
    scf.if %4 {
      %cst_27 = arith.constant 0x7F800000 : f32
      %58 = vector.broadcast %cst_27 : f32 to vector<8x128xf32>
      %59 = arith.index_cast %arg2 : i32 to index
      %c0_28 = arith.constant 0 : index
      %c0_29 = arith.constant 0 : index
      %60 = vector.load %arg6[%59, %c0_28, %c0_29] : memref<1x8x128xf32, #tpu.memory_space<vmem>>, vector<1x8x128xf32>
      %61 = vector.shape_cast %60 : vector<1x8x128xf32> to vector<8x128xf32>
      %62 = vector.shape_cast %58 : vector<8x128xf32> to vector<1x8x128xf32>
      tpu.vector_store %arg6[%59, %c0_28, %c0_29], %62 {strides = array<i32>} : memref<1x8x128xf32, #tpu.memory_space<vmem>>, vector<1x8x128xf32>,
    } else {
    }
    %5 = arith.index_cast %arg2 : i32 to index
    %c0_3 = arith.constant 0 : index
    %c0_4 = arith.constant 0 : index
    %6 = vector.load %arg6[%5, %c0_3, %c0_4] : memref<1x8x128xf32, #tpu.memory_space<vmem>>, vector<1x8x128xf32>
    %7 = vector.shape_cast %6 : vector<1x8x128xf32> to vector<8x128xf32>
    %c0_5 = arith.constant 0 : index
    %c0_6 = arith.constant 0 : index
    %c0_7 = arith.constant 0 : index
    %8 = vector.load %arg3[%c0_5, %c0_6, %c0_7] : memref<1x64x8xf32, #tpu.memory_space<vmem>>, vector<1x64x8xf32>
    %9 = vector.shape_cast %8 : vector<1x64x8xf32> to vector<64x8xf32>
    %cst = arith.constant dense<0.000000e+00> : vector<64x128xf32>
    %10 = tpu.matmul %9, %1, %cst {dimension_numbers = #tpu.dot_dimension_numbers<[1], [0], [0], [1], [0, 0, 1, 1], [], []>} : vector<64x8xf32>, vector<8x128xf32>, vector<64x128xf32> -> vector<64x128xf32>
    %11 = vector.extract_strided_slice %10 {offsets = [0, 0], sizes = [8, 128], strides = [1, 1]} : vector<64x128xf32> to vector<8x128xf32>
    %12 = arith.minimumf %7, %11 : vector<8x128xf32>
    %13 = vector.extract_strided_slice %10 {offsets = [8, 0], sizes = [8, 128], strides = [1, 1]} : vector<64x128xf32> to vector<8x128xf32>
    %14 = arith.minimumf %12, %13 : vector<8x128xf32>
    %15 = vector.extract_strided_slice %10 {offsets = [16, 0], sizes = [8, 128], strides = [1, 1]} : vector<64x128xf32> to vector<8x128xf32>
    %16 = arith.minimumf %14, %15 : vector<8x128xf32>
    %17 = vector.extract_strided_slice %10 {offsets = [24, 0], sizes = [8, 128], strides = [1, 1]} : vector<64x128xf32> to vector<8x128xf32>
    %18 = arith.minimumf %16, %17 : vector<8x128xf32>
    %19 = vector.extract_strided_slice %10 {offsets = [32, 0], sizes = [8, 128], strides = [1, 1]} : vector<64x128xf32> to vector<8x128xf32>
    %20 = arith.minimumf %18, %19 : vector<8x128xf32>
    %21 = vector.extract_strided_slice %10 {offsets = [40, 0], sizes = [8, 128], strides = [1, 1]} : vector<64x128xf32> to vector<8x128xf32>
    %22 = arith.minimumf %20, %21 : vector<8x128xf32>
    %23 = vector.extract_strided_slice %10 {offsets = [48, 0], sizes = [8, 128], strides = [1, 1]} : vector<64x128xf32> to vector<8x128xf32>
    %24 = arith.minimumf %22, %23 : vector<8x128xf32>
    %25 = vector.extract_strided_slice %10 {offsets = [56, 0], sizes = [8, 128], strides = [1, 1]} : vector<64x128xf32> to vector<8x128xf32>
    %26 = arith.minimumf %24, %25 : vector<8x128xf32>
    %c0_i32_8 = arith.constant 0 : i32
    %27 = arith.cmpi eq, %arg2, %c0_i32_8 : i32
    %28 = arith.extui %27 : i1 to i32
    %c0_i32_9 = arith.constant 0 : i32
    %29 = arith.cmpi ne, %28, %c0_i32_9 : i32
    scf.if %29 {
      %c0_27 = arith.constant 0 : index
      %c0_28 = arith.constant 0 : index
      %58 = vector.load %arg7[%c0_27, %c0_28] : memref<64x128xf32, #tpu.memory_space<vmem>>, vector<64x128xf32>
      tpu.vector_store %arg7[%c0_27, %c0_28], %10 {strides = array<i32>} : memref<64x128xf32, #tpu.memory_space<vmem>>, vector<64x128xf32>,
    } else {
    }
    %c0_i32_10 = arith.constant 0 : i32
    %30 = arith.cmpi sgt, %arg2, %c0_i32_10 : i32
    %31 = arith.extui %30 : i1 to i32
    %c0_i32_11 = arith.constant 0 : i32
    %32 = arith.cmpi ne, %31, %c0_i32_11 : i32
    scf.if %32 {
      %c0_27 = arith.constant 0 : index
      %c0_28 = arith.constant 0 : index
      %58 = vector.load %arg7[%c0_27, %c0_28] : memref<64x128xf32, #tpu.memory_space<vmem>>, vector<64x128xf32>
      %59 = arith.minimumf %58, %10 : vector<64x128xf32>
      %c0_29 = arith.constant 0 : index
      %c0_30 = arith.constant 0 : index
      %60 = vector.load %arg7[%c0_29, %c0_30] : memref<64x128xf32, #tpu.memory_space<vmem>>, vector<64x128xf32>
      tpu.vector_store %arg7[%c0_29, %c0_30], %59 {strides = array<i32>} : memref<64x128xf32, #tpu.memory_space<vmem>>, vector<64x128xf32>,
    } else {
    }
    %33 = arith.index_cast %arg2 : i32 to index
    %c0_12 = arith.constant 0 : index
    %c0_13 = arith.constant 0 : index
    %34 = vector.load %arg6[%33, %c0_12, %c0_13] : memref<1x8x128xf32, #tpu.memory_space<vmem>>, vector<1x8x128xf32>
    %35 = vector.shape_cast %34 : vector<1x8x128xf32> to vector<8x128xf32>
    %36 = vector.shape_cast %26 : vector<8x128xf32> to vector<1x8x128xf32>
    tpu.vector_store %arg6[%33, %c0_12, %c0_13], %36 {strides = array<i32>} : memref<1x8x128xf32, #tpu.memory_space<vmem>>, vector<1x8x128xf32>,
    %c0_i32_14 = arith.constant 0 : i32
    %37 = arith.cmpi eq, %arg1, %c0_i32_14 : i32
    %c0_i32_15 = arith.constant 0 : i32
    %38 = arith.cmpi eq, %arg2, %c0_i32_15 : i32
    %39 = arith.andi %37, %38 : i1
    %40 = arith.extui %39 : i1 to i32
    %c0_i32_16 = arith.constant 0 : i32
    %41 = arith.cmpi ne, %40, %c0_i32_16 : i32
    scf.if %41 {
      %cst_27 = arith.constant 0xFF800000 : f32
      %58 = vector.broadcast %cst_27 : f32 to vector<1x1xf32>
      %c0_28 = arith.constant 0 : index
      %c0_29 = arith.constant 0 : index
      %59 = vector.load %arg8[%c0_28, %c0_29] : memref<1x1xf32, #tpu.memory_space<vmem>>, vector<1x1xf32>
      tpu.vector_store %arg8[%c0_28, %c0_29], %58 {strides = array<i32>} : memref<1x1xf32, #tpu.memory_space<vmem>>, vector<1x1xf32>,
    } else {
    }
    %c0_i32_17 = arith.constant 0 : i32
    %42 = arith.cmpi eq, %arg1, %c0_i32_17 : i32
    %43 = arith.extui %42 : i1 to i32
    %c0_i32_18 = arith.constant 0 : i32
    %44 = arith.cmpi ne, %43, %c0_i32_18 : i32
    scf.if %44 {
      %cst_27 = arith.constant dense<0x7F800000> : vector<128xf32>
      %58 = vector.multi_reduction <minimumf>, %26, %cst_27 [0] : vector<8x128xf32> to vector<128xf32>
      %59 = vector.shape_cast %58 : vector<128xf32> to vector<1x128xf32>
      %c128_i32 = arith.constant 128 : i32
      %60 = arith.muli %arg2, %c128_i32 : i32
      %61 = tpu.iota {dimensions = array<i32: 1>} : vector<1x128xi32>
      %62 = vector.broadcast %60 : i32 to vector<1x128xi32>
      %63 = arith.addi %62, %61 : vector<1x128xi32>
      %c8_i32 = arith.constant 8 : i32
      %64 = vector.broadcast %c8_i32 : i32 to vector<1x128xi32>
      %65 = arith.cmpi slt, %63, %64 : vector<1x128xi32>
      %cst_28 = arith.constant 0xFF800000 : f32
      %66 = vector.broadcast %cst_28 : f32 to vector<1x128xf32>
      %67 = arith.select %65, %59, %66 : vector<1x128xi1>, vector<1x128xf32>
      %c0_29 = arith.constant 0 : index
      %c0_30 = arith.constant 0 : index
      %68 = vector.load %arg8[%c0_29, %c0_30] : memref<1x1xf32, #tpu.memory_space<vmem>>, vector<1x1xf32>
      %cst_31 = arith.constant dense<0xFF800000> : vector<1xf32>
      %69 = vector.multi_reduction <maximumf>, %67, %cst_31 [1] : vector<1x128xf32> to vector<1xf32>
      %70 = vector.shape_cast %69 : vector<1xf32> to vector<1x1xf32>
      %71 = arith.maximumf %68, %70 : vector<1x1xf32>
      %c0_32 = arith.constant 0 : index
      %c0_33 = arith.constant 0 : index
      %72 = vector.load %arg8[%c0_32, %c0_33] : memref<1x1xf32, #tpu.memory_space<vmem>>, vector<1x1xf32>
      tpu.vector_store %arg8[%c0_32, %c0_33], %71 {strides = array<i32>} : memref<1x1xf32, #tpu.memory_space<vmem>>, vector<1x1xf32>,
    } else {
    }
    %c0_i32_19 = arith.constant 0 : i32
    %45 = arith.cmpi eq, %arg2, %c0_i32_19 : i32
    %c0_i32_20 = arith.constant 0 : i32
    %46 = arith.cmpi eq, %arg1, %c0_i32_20 : i32
    %47 = arith.andi %45, %46 : i1
    %48 = arith.extui %47 : i1 to i32
    %c0_i32_21 = arith.constant 0 : i32
    %49 = arith.cmpi ne, %48, %c0_i32_21 : i32
    scf.if %49 {
      %cst_27 = arith.constant 0xFF800000 : f32
      %58 = vector.broadcast %cst_27 : f32 to vector<1x1xf32>
      %c0_28 = arith.constant 0 : index
      %c0_29 = arith.constant 0 : index
      %59 = vector.load %arg9[%c0_28, %c0_29] : memref<1x1xf32, #tpu.memory_space<vmem>>, vector<1x1xf32>
      tpu.vector_store %arg9[%c0_28, %c0_29], %58 {strides = array<i32>} : memref<1x1xf32, #tpu.memory_space<vmem>>, vector<1x1xf32>,
    } else {
    }
    %c0_i32_22 = arith.constant 0 : i32
    %50 = arith.cmpi eq, %arg2, %c0_i32_22 : i32
    %51 = arith.extui %50 : i1 to i32
    %c0_i32_23 = arith.constant 0 : i32
    %52 = arith.cmpi ne, %51, %c0_i32_23 : i32
    scf.if %52 {
      %c0_27 = arith.constant 0 : index
      %c0_28 = arith.constant 0 : index
      %58 = vector.load %arg7[%c0_27, %c0_28] : memref<64x128xf32, #tpu.memory_space<vmem>>, vector<64x128xf32>
      %cst_29 = arith.constant dense<0x7F800000> : vector<64xf32>
      %59 = vector.multi_reduction <minimumf>, %58, %cst_29 [1] : vector<64x128xf32> to vector<64xf32>
      %60 = vector.shape_cast %59 : vector<64xf32> to vector<64x1xf32>
      %c64_i32 = arith.constant 64 : i32
      %61 = arith.muli %arg1, %c64_i32 : i32
      %62 = tpu.iota {dimensions = array<i32: 0>} : vector<64x1xi32>
      %63 = vector.broadcast %61 : i32 to vector<64x1xi32>
      %64 = arith.addi %63, %62 : vector<64x1xi32>
      %c16_i32 = arith.constant 16 : i32
      %65 = vector.broadcast %c16_i32 : i32 to vector<64x1xi32>
      %66 = arith.cmpi slt, %64, %65 : vector<64x1xi32>
      %cst_30 = arith.constant 0xFF800000 : f32
      %67 = vector.broadcast %cst_30 : f32 to vector<64x1xf32>
      %68 = arith.select %66, %60, %67 : vector<64x1xi1>, vector<64x1xf32>
      %c0_31 = arith.constant 0 : index
      %c0_32 = arith.constant 0 : index
      %69 = vector.load %arg9[%c0_31, %c0_32] : memref<1x1xf32, #tpu.memory_space<vmem>>, vector<1x1xf32>
      %cst_33 = arith.constant dense<0xFF800000> : vector<1xf32>
      %70 = vector.multi_reduction <maximumf>, %68, %cst_33 [0] : vector<64x1xf32> to vector<1xf32>
      %71 = vector.shape_cast %70 : vector<1xf32> to vector<1x1xf32>
      %72 = arith.maximumf %69, %71 : vector<1x1xf32>
      %c0_34 = arith.constant 0 : index
      %c0_35 = arith.constant 0 : index
      %73 = vector.load %arg9[%c0_34, %c0_35] : memref<1x1xf32, #tpu.memory_space<vmem>>, vector<1x1xf32>
      tpu.vector_store %arg9[%c0_34, %c0_35], %72 {strides = array<i32>} : memref<1x1xf32, #tpu.memory_space<vmem>>, vector<1x1xf32>,
    } else {
    }
    %c0_i32_24 = arith.constant 0 : i32
    %53 = arith.cmpi eq, %arg1, %c0_i32_24 : i32
    %c0_i32_25 = arith.constant 0 : i32
    %54 = arith.cmpi eq, %arg2, %c0_i32_25 : i32
    %55 = arith.andi %53, %54 : i1
    %56 = arith.extui %55 : i1 to i32
    %c0_i32_26 = arith.constant 0 : i32
    %57 = arith.cmpi ne, %56, %c0_i32_26 : i32
    scf.if %57 {
      %c0_27 = arith.constant 0 : index
      %c0_28 = arith.constant 0 : index
      %58 = vector.load %arg8[%c0_27, %c0_28] : memref<1x1xf32, #tpu.memory_space<vmem>>, vector<1x1xf32>
      %c0_29 = arith.constant 0 : index
      %c0_30 = arith.constant 0 : index
      %59 = vector.load %arg9[%c0_29, %c0_30] : memref<1x1xf32, #tpu.memory_space<vmem>>, vector<1x1xf32>
      %60 = arith.addf %58, %59 : vector<1x1xf32>
      %cst_31 = arith.constant 5.000000e-01 : f32
      %61 = vector.broadcast %cst_31 : f32 to vector<1x1xf32>
      %62 = arith.mulf %60, %61 : vector<1x1xf32>
      %c0_32 = arith.constant 0 : index
      %c0_33 = arith.constant 0 : index
      %c0_34 = arith.constant 0 : index
      %63 = vector.load %arg5[%c0_32, %c0_33, %c0_34] : memref<1x1x1xf32, #tpu.memory_space<vmem>>, vector<1x1x1xf32>
      %64 = vector.shape_cast %63 : vector<1x1x1xf32> to vector<1x1xf32>
      %65 = vector.shape_cast %62 : vector<1x1xf32> to vector<1x1x1xf32>
      tpu.vector_store %arg5[%c0_32, %c0_33, %c0_34], %65 {strides = array<i32>} : memref<1x1x1xf32, #tpu.memory_space<vmem>>, vector<1x1x1xf32>,
    } else {
    }
    return
  }
  func.func @transform_0(%arg0: i32, %arg1: i32, %arg2: i32) -> (i32, i32, i32) {
    %c0_i32 = arith.constant 0 : i32
    %c0_i32_0 = arith.constant 0 : i32
    return %arg0, %arg1, %c0_i32 : i32, i32, i32
  }
  func.func @transform_1(%arg0: i32, %arg1: i32, %arg2: i32) -> (i32, i32, i32) {
    %c0_i32 = arith.constant 0 : i32
    %c0_i32_0 = arith.constant 0 : i32
    return %arg0, %c0_i32, %arg2 : i32, i32, i32
  }
  func.func @transform_2(%arg0: i32, %arg1: i32, %arg2: i32) -> (i32, i32, i32) {
    %c0_i32 = arith.constant 0 : i32
    %c0_i32_0 = arith.constant 0 : i32
    %c0_i32_1 = arith.constant 0 : i32
    return %arg0, %c0_i32, %c0_i32_0 : i32, i32, i32
  }
}

</mosaic_0001>

<llo_original>
// kernel: tpu_custom_call.1
$region0: #{tpu_custom_call.1}
  #allocation0 [shape = 'u32[]', space=smem, size = 0x4, offset = 0x4, fixed_abs, tag = 'smem constant byte address 0x4 - core index']
  #allocation1 [shape = 'u32[144,128]{1,0:T(1,128)}', space=vmem, size = 0x12000, scoped, tag = 'internal scratch']
  #allocation2 [shape = 'f32[1,8,128]{2,1,0:T(8,128)}', space=vmem, size = 0x1000, scoped, tag = 'scratch operand']
  #allocation3 [shape = 'f32[64,128]{1,0:T(8,128)}', space=vmem, size = 0x8000, scoped, tag = 'scratch operand']
  #allocation4 [shape = 'f32[1,1]{1,0:T(1,128)}', space=vmem, size = 0x200, scoped, tag = 'scratch operand']
  #allocation5 [shape = 'f32[1,1]{1,0:T(1,128)}', space=vmem, size = 0x200, scoped, tag = 'scratch operand']
  %s0 = inlined_call_operand.vmem [shape: f32[2,64,8], index: 0, kind: input, shape index: {}]
  %s1 = inlined_call_operand.vmem [shape: f32[2,8,128], index: 1, kind: input, shape index: {}]
  %s2 = inlined_call_operand.vmem [shape: f32[2,1,1], index: 2, kind: output, shape index: {}]
  %s3 = sld [smem:[#allocation0]]
  $region73: #{tpu_custom_call.1} parent=0
    _
  %s5 = ssub.s32 1, %s3
  %s6 = scalar_select 0, %s5, %s3
  loop: start=0, step=1, limit=4
  $region2: #{tpu_custom_call.1} parent=0 // loop_pre_header
    _
  $region3: #{tpu_custom_call.1} parent=0 // loop_header
    %s8 = sphi 0, %s12
    %p9 = scmp.ge.s32.totalorder %s8, 4
    %s15 = sphi 0, %s34
    %s16 = sphi 0, %s30
    %s17 = sphi 0, %s26
    %s18 = sphi 0, %s15
    %s19 = sphi 0, %s16
    %s20 = sphi 0, %s17
    %s21 = sphi 0, %s18
    %s22 = sphi 0, %s19
    %s23 = sphi 0, %s20
    %s39 = sphi 0, %s41
    %s42 = sphi 0, %s39
    %s43 = sphi 0, %s42
    %s59 = sphi 0, %s43
    %s67 = sphi 0, %s69
    %s70 = sphi 0, %s67
    %s71 = sphi 0, %s70
    %s87 = sphi 0, %s71
    %s93 = sphi 0, %s95
    %s96 = sphi 0, %s93
    %s97 = sphi 0, %s96
    %s113 = sphi 0, %s97
  $region4: #{tpu_custom_call.1} parent=0 // loop_header_branch
    %11 = sbr.rel (%p9) target = $region8
  $region5: #{tpu_custom_call.1} parent=0 // loop_body
    %s13 = ssub.s32 %s8, 1
    %s14 = ssub.s32 %s8, 2
    %s24 = sadd.s32 1, %s17
    %p25 = scmp.ge.s32.totalorder %s24, 1
    %s26 = scalar_select %p25, 0, %s24
    %s27 = sadd.s32 1, %s16
    %s28 = scalar_select %p25, %s27, %s16
    %p29 = scmp.ge.s32.totalorder %s28, 1
    %s30 = scalar_select %p29, 0, %s28
    %s31 = sadd.s32 1, %s15
    %s32 = scalar_select %p29, %s31, %s15
    %p33 = scmp.ge.s32.totalorder %s32, 2
    %s34 = scalar_select %p33, 0, %s32
    %s35 = ssub.s32 %s15, %s34
    %s36 = ssub.s32 %s16, %s30
    %s37 = sor.u32 %s35, %s36
    %p38 = scmp.eq.s32.totalorder %s37, 0
    %s40 = sadd.s32 %s39, 1
    %s41 = scalar_select %p38, %s39, %s40
    %p44 = pneg %p38
    %p45 = scmp.eq.s32.totalorder %s8, 1
    %p46 = por %p44, %p45
    %p47 = scmp.ne.s32.totalorder %s39, %s42
    %p48 = scmp.eq.s32.totalorder %s8, 0
    %p49 = por %p47, %p48
    %p50 = scmp.ne.s32.totalorder %s39, %s42
    %p51 = scmp.eq.s32.totalorder %s13, 1
    %p52 = por %p50, %p51
    %p53 = scmp.ne.s32.totalorder %s42, %s43
    %p54 = scmp.eq.s32.totalorder %s13, 0
    %p55 = por %p53, %p54
    %p56 = scmp.ne.s32.totalorder %s42, %s43
    %p57 = scmp.eq.s32.totalorder %s14, 1
    %p58 = por %p56, %p57
    %p60 = scmp.ne.s32.totalorder %s43, %s59
    %p61 = scmp.eq.s32.totalorder %s14, 0
    %p62 = por %p60, %p61
    %s63 = ssub.s32 %s15, %s34
    %s64 = ssub.s32 %s17, %s26
    %s65 = sor.u32 %s63, %s64
    %p66 = scmp.eq.s32.totalorder %s65, 0
    %s68 = sadd.s32 %s67, 1
    %s69 = scalar_select %p66, %s67, %s68
    %p72 = pneg %p66
    %p73 = scmp.eq.s32.totalorder %s8, 1
    %p74 = por %p72, %p73
    %p75 = scmp.ne.s32.totalorder %s67, %s70
    %p76 = scmp.eq.s32.totalorder %s8, 0
    %p77 = por %p75, %p76
    %p78 = scmp.ne.s32.totalorder %s67, %s70
    %p79 = scmp.eq.s32.totalorder %s13, 1
    %p80 = por %p78, %p79
    %p81 = scmp.ne.s32.totalorder %s70, %s71
    %p82 = scmp.eq.s32.totalorder %s13, 0
    %p83 = por %p81, %p82
    %p84 = scmp.ne.s32.totalorder %s70, %s71
    %p85 = scmp.eq.s32.totalorder %s14, 1
    %p86 = por %p84, %p85
    %p88 = scmp.ne.s32.totalorder %s71, %s87
    %p89 = scmp.eq.s32.totalorder %s14, 0
    %p90 = por %p88, %p89
    %s91 = ssub.s32 %s15, %s34
    %p92 = scmp.eq.s32.totalorder %s91, 0
    %s94 = sadd.s32 %s93, 1
    %s95 = scalar_select %p92, %s93, %s94
    %p98 = pneg %p92
    %p99 = scmp.eq.s32.totalorder %s8, 1
    %p100 = por %p98, %p99
    %p101 = scmp.ne.s32.totalorder %s93, %s96
    %p102 = scmp.eq.s32.totalorder %s8, 0
    %p103 = por %p101, %p102
    %p104 = scmp.ne.s32.totalorder %s93, %s96
    %p105 = scmp.eq.s32.totalorder %s13, 1
    %p106 = por %p104, %p105
    %p107 = scmp.ne.s32.totalorder %s96, %s97
    %p108 = scmp.eq.s32.totalorder %s13, 0
    %p109 = por %p107, %p108
    %p110 = scmp.ne.s32.totalorder %s96, %s97
    %p111 = scmp.eq.s32.totalorder %s14, 1
    %p112 = por %p110, %p111
    %p114 = scmp.ne.s32.totalorder %s97, %s113
    %p115 = scmp.eq.s32.totalorder %s14, 0
    %p116 = por %p114, %p115
    %p117 = scmp.le.s32.totalorder 1, %s8
    %p118 = scmp.lt.s32.totalorder %s8, 3
    %p119 = pnand %p117, %p118
    %p120 = pneg %p119
    // Predicated region
    $region9: #{tpu_custom_call.1} parent=5 // pred_check
      _
    $region10: #{tpu_custom_call.1} parent=5 // pred_check_branch
      %122 = sbr.rel (%p119) target = $region12
    $region11: #{tpu_custom_call.1} parent=5 // pred_region
      %s123 = ssub.s32 %s8, 1
    $region12: #{tpu_custom_call.1} parent=5 // pred_fallthru
      _
    %p124 = scmp.lt.s32.totalorder %s8, 2
    // Predicated region
    $region13: #{tpu_custom_call.1} parent=5 // pred_check
      %p125 = pneg %p124
    $region14: #{tpu_custom_call.1} parent=5 // pred_check_branch
      %127 = sbr.rel (%p125) target = $region16
    $region15: #{tpu_custom_call.1} parent=5 // pred_region
      // Predicated region
      $region17: #{tpu_custom_call.1} parent=15 // pred_check
        %p128 = pneg %p49
      $region18: #{tpu_custom_call.1} parent=15 // pred_check_branch
        %130 = sbr.rel (%p128) target = $region20
      $region19: #{tpu_custom_call.1} parent=15 // pred_region
        %s131 = smul.u32 8, %s16
        %p132 = scmp.lt.s32.totalorder %s15, 1
        %s133 = scalar_select %p132, %s15, 1
        %p134 = scmp.lt.s32.totalorder %s131, 7
        %s135 = scalar_select %p134, %s131, 7
        %s136 = smul.addr %s133, 8
        %s137 = sadd.s32 %s135, %s136
        %s138 = smul.addr %s137, 8
        %s139 = scalar_lea.vmem %s0, %s138
        %s140 = smul.u32 8, %s16
      $region20: #{tpu_custom_call.1} parent=15 // pred_fallthru
        _
      // Predicated region
      $region21: #{tpu_custom_call.1} parent=15 // pred_check
        %p141 = pneg %p77
      $region22: #{tpu_custom_call.1} parent=15 // pred_check_branch
        %143 = sbr.rel (%p141) target = $region24
      $region23: #{tpu_custom_call.1} parent=15 // pred_region
        %p144 = scmp.lt.s32.totalorder %s15, 1
        %s145 = scalar_select %p144, %s15, 1
        %p146 = scmp.lt.s32.totalorder %s17, 0
        %s147 = scalar_select %p146, %s17, 0
        %s148 = sadd.s32 %s147, %s145
        %s149 = smul.addr %s148, 8
        %s150 = scalar_lea.vmem %s1, %s149
      $region24: #{tpu_custom_call.1} parent=15 // pred_fallthru
        _
    $region16: #{tpu_custom_call.1} parent=5 // pred_fallthru
      _
    %p151 = scmp.le.s32.totalorder 1, %s8
    %p152 = scmp.lt.s32.totalorder %s8, 3
    %p153 = pnand %p151, %p152
    %p154 = pneg %p153
    // Predicated region
    $region25: #{tpu_custom_call.1} parent=5 // pred_check
      _
    $region26: #{tpu_custom_call.1} parent=5 // pred_check_branch
      %156 = sbr.rel (%p153) target = $region28
    $region27: #{tpu_custom_call.1} parent=5 // pred_region
      %s157 = ssub.s32 %s8, 1
      %s158 = smul.u32 8, %s19
      %p159 = scmp.lt.s32.totalorder %s18, 1
      %s160 = scalar_select %p159, %s18, 1
      %p161 = scmp.lt.s32.totalorder %s158, 7
      %s162 = scalar_select %p161, %s158, 7
      %s163 = smul.addr %s160, 8
      %s164 = sadd.s32 %s162, %s163
      %s165 = smul.addr %s164, 8
      %s166 = scalar_lea.vmem %s0, %s165
      %p167 = pneg %p55
      %p168 = pneg %p52
      %p169 = scmp.lt.s32.totalorder %s18, 1
      %s170 = scalar_select %p169, %s18, 1
      %p171 = scmp.lt.s32.totalorder %s20, 0
      %s172 = scalar_select %p171, %s20, 0
      %s173 = sadd.s32 %s172, %s170
      %s174 = smul.addr %s173, 8
      %s175 = scalar_lea.vmem %s1, %s174
      %p176 = pneg %p83
      %p177 = pneg %p80
      %p178 = pneg %p109
      %p179 = pneg %p106
      %p180 = scmp.lt.s32.totalorder %s18, 1
      %s181 = scalar_select %p180, %s18, 1
      %s182 = scalar_lea.vmem %s2, %s181
      %s183 = smul.u32 8, %s19
      %p184 = scmp.lt.s32.totalorder %s18, 1
      %s185 = scalar_select %p184, %s18, 1
      %p186 = scmp.lt.s32.totalorder %s183, 7
      %s187 = scalar_select %p186, %s183, 7
      %s188 = smul.addr %s185, 8
      %s189 = sadd.s32 %s187, %s188
      %s190 = smul.addr %s189, 8
      %s191 = scalar_lea.vmem %s0, %s190
      %s192 = smul.u32 8, %s19
      %p193 = scmp.lt.s32.totalorder %s18, 1
      %s194 = scalar_select %p193, %s18, 1
      %p195 = scmp.lt.s32.totalorder %s20, 0
      %s196 = scalar_select %p195, %s20, 0
      %s197 = sadd.s32 %s196, %s194
      %s198 = smul.addr %s197, 8
      %s199 = scalar_lea.vmem %s1, %s198
      %p200 = scmp.lt.s32.totalorder %s18, 1
      %s201 = scalar_select %p200, %s18, 1
      %s202 = scalar_lea.vmem %s2, %s201
      %v203 = vld [vmem:[%s199] sm:$0xff]
      %p204 = scmp.eq.s32.totalorder %s19, 0
      // Predicated region
      $region29: #{tpu_custom_call.1} parent=27 // pred_check
        %p205 = pneg %p204
      $region30: #{tpu_custom_call.1} parent=27 // pred_check_branch
        %207 = sbr.rel (%p205) target = $region32
      $region31: #{tpu_custom_call.1} parent=27 // pred_region
        %s208 = smul.u32 %s20, 8
        %s209 = scalar_lea.vmem [#allocation2], %s208
        %210 = vst [vmem:[%s209] sm:$0xff] inf
      $region32: #{tpu_custom_call.1} parent=27 // pred_fallthru
        _
      %s211 = smul.u32 %s20, 8
      %s212 = scalar_lea.vmem [#allocation2], %s211
      %v213 = vld [vmem:[%s212] sm:$0xff]
      %v214 = vld [vmem:[%s191] sm:$0xff]
      %v215 = vld [vmem:[%s191 + $0x8] sm:$0xff]
      %v216 = vld [vmem:[%s191 + $0x10] sm:$0xff]
      %v217 = vld [vmem:[%s191 + $0x18] sm:$0xff]
      %v218 = vld [vmem:[%s191 + $0x20] sm:$0xff]
      %v219 = vld [vmem:[%s191 + $0x28] sm:$0xff]
      %v220 = vld [vmem:[%s191 + $0x30] sm:$0xff]
      %v221 = vld [vmem:[%s191 + $0x38] sm:$0xff]
      %vm222 = vcmask 64512
      %v224 = vsel %vm222, %v214, 0
      %v227 = vsel %vm222, %v215, 0
      %v230 = vsel %vm222, %v216, 0
      %v233 = vsel %vm222, %v217, 0
      %v236 = vsel %vm222, %v218, 0
      %v239 = vsel %vm222, %v219, 0
      %v242 = vsel %vm222, %v220, 0
      %v245 = vsel %vm222, %v221, 0
      %247 = vmatprep.subr.mxu0 0.0
      %248 = vmatpush1.msra.mxu0 0.0
      %249 = vmatprep.subr.mxu0 0.0
      %250 = vmatpush1.msra.mxu0 0.0
      %251 = vmatprep.subr.mxu0 0.0
      %252 = vmatpush1.msra.mxu0 0.0
      %253 = vmatprep.subr.mxu0 0.0
      %254 = vmatpush1.msra.mxu0 0.0
      %255 = vmatprep.subr.mxu0 0.0
      %256 = vmatpush1.msra.mxu0 0.0
      %257 = vmatprep.subr.mxu0 0.0
      %258 = vmatpush1.msra.mxu0 0.0
      %259 = vmatprep.subr.mxu0 0.0
      %260 = vmatpush1.msra.mxu0 0.0
      %261 = vmatprep.subr.mxu0 0.0
      %262 = vmatpush1.msra.mxu0 0.0
      %263 = vmatprep.subr.mxu0 0.0
      %264 = vmatpush1.msra.mxu0 0.0
      %265 = vmatprep.subr.mxu0 0.0
      %266 = vmatpush1.msra.mxu0 0.0
      %267 = vmatprep.subr.mxu0 0.0
      %268 = vmatpush1.msra.mxu0 0.0
      %269 = vmatprep.subr.mxu0 0.0
      %270 = vmatpush1.msra.mxu0 0.0
      %271 = vmatprep.subr.mxu0 0.0
      %272 = vmatpush1.msra.mxu0 0.0
      %273 = vmatprep.subr.mxu0 0.0
      %274 = vmatpush1.msra.mxu0 0.0
      %275 = vmatprep.subr.mxu0 0.0
      %276 = vmatpush1.msra.mxu0 0.0
      %277 = vmatprep.subr.mxu0 0.0
      %278 = vmatpush1.msra.mxu0 %v203
      %279 = vmatprep.subr.mxu0 0.0
      %280 = vmatpush2.msra.mxu0 0.0
      %281 = vmatprep.subr.mxu0 0.0
      %282 = vmatpush2.msra.mxu0 0.0
      %283 = vmatprep.subr.mxu0 0.0
      %284 = vmatpush2.msra.mxu0 0.0
      %285 = vmatprep.subr.mxu0 0.0
      %286 = vmatpush2.msra.mxu0 0.0
      %287 = vmatprep.subr.mxu0 0.0
      %288 = vmatpush2.msra.mxu0 0.0
      %289 = vmatprep.subr.mxu0 0.0
      %290 = vmatpush2.msra.mxu0 0.0
      %291 = vmatprep.subr.mxu0 0.0
      %292 = vmatpush2.msra.mxu0 0.0
      %293 = vmatprep.subr.mxu0 0.0
      %294 = vmatpush2.msra.mxu0 0.0
      %295 = vmatprep.subr.mxu0 0.0
      %296 = vmatpush2.msra.mxu0 0.0
      %297 = vmatprep.subr.mxu0 0.0
      %298 = vmatpush2.msra.mxu0 0.0
      %299 = vmatprep.subr.mxu0 0.0
      %300 = vmatpush2.msra.mxu0 0.0
      %301 = vmatprep.subr.mxu0 0.0
      %302 = vmatpush2.msra.mxu0 0.0
      %303 = vmatprep.subr.mxu0 0.0
      %304 = vmatpush2.msra.mxu0 0.0
      %305 = vmatprep.subr.mxu0 0.0
      %306 = vmatpush2.msra.mxu0 0.0
      %307 = vmatprep.subr.mxu0 0.0
      %308 = vmatpush2.msra.mxu0 0.0
      %309 = vmatprep.subr.mxu0 0.0
      %310 = vmatpush2.msra.mxu0 0.0
      %311 = vmatprep.mubr.f32.mxu0 0.0
      %312 = vmatmul.mubr.f32.gmra.mxu0 %v224
      %v313 = vpop.f32.mrf.mxu0
      %v314 = vadd.f32 0.0, %v313
      %v315 = vpop.f32.mrf.mxu0
      %316 = vmatprep.mubr.f32.mxu0 0.0
      %317 = vmatmul.mubr.f32.gmra.mxu0 %v227
      %v318 = vpop.f32.mrf.mxu0
      %v319 = vadd.f32 0.0, %v318
      %v320 = vpop.f32.mrf.mxu0
      %321 = vmatprep.mubr.f32.mxu0 0.0
      %322 = vmatmul.mubr.f32.gmra.mxu0 %v230
      %v323 = vpop.f32.mrf.mxu0
      %v324 = vadd.f32 0.0, %v323
      %v325 = vpop.f32.mrf.mxu0
      %326 = vmatprep.mubr.f32.mxu0 0.0
      %327 = vmatmul.mubr.f32.gmra.mxu0 %v233
      %v328 = vpop.f32.mrf.mxu0
      %v329 = vadd.f32 0.0, %v328
      %v330 = vpop.f32.mrf.mxu0
      %331 = vmatprep.mubr.f32.mxu0 0.0
      %332 = vmatmul.mubr.f32.gmra.mxu0 %v236
      %v333 = vpop.f32.mrf.mxu0
      %v334 = vadd.f32 0.0, %v333
      %v335 = vpop.f32.mrf.mxu0
      %336 = vmatprep.mubr.f32.mxu0 0.0
      %337 = vmatmul.mubr.f32.gmra.mxu0 %v239
      %v338 = vpop.f32.mrf.mxu0
      %v339 = vadd.f32 0.0, %v338
      %v340 = vpop.f32.mrf.mxu0
      %341 = vmatprep.mubr.f32.mxu0 0.0
      %342 = vmatmul.mubr.f32.gmra.mxu0 %v242
      %v343 = vpop.f32.mrf.mxu0
      %v344 = vadd.f32 0.0, %v343
      %v345 = vpop.f32.mrf.mxu0
      %346 = vmatprep.mubr.f32.mxu0 0.0
      %347 = vmatmul.mubr.f32.gmra.mxu0 %v245
      %v348 = vpop.f32.mrf.mxu0
      %v349 = vadd.f32 0.0, %v348
      %v350 = vpop.f32.mrf.mxu0
      %351 = vdwg.mxu0
      %v352 = vmin.f32 %v213, %v314
      %v353 = vmin.f32 %v352, %v319
      %v354 = vmin.f32 %v353, %v324
      %v355 = vmin.f32 %v354, %v329
      %v356 = vmin.f32 %v355, %v334
      %v357 = vmin.f32 %v356, %v339
      %v358 = vmin.f32 %v357, %v344
      %v359 = vmin.f32 %v358, %v349
      %p360 = scmp.eq.s32.totalorder %s20, 0
      // Predicated region
      $region33: #{tpu_custom_call.1} parent=27 // pred_check
        %p361 = pneg %p360
      $region34: #{tpu_custom_call.1} parent=27 // pred_check_branch
        %363 = sbr.rel (%p361) target = $region36
      $region35: #{tpu_custom_call.1} parent=27 // pred_region
        %364 = vst [vmem:[#allocation3] sm:$0xff] %v314
        %365 = vst [vmem:[#allocation3 + $0x8] sm:$0xff] %v319
        %366 = vst [vmem:[#allocation3 + $0x10] sm:$0xff] %v324
        %367 = vst [vmem:[#allocation3 + $0x18] sm:$0xff] %v329
        %368 = vst [vmem:[#allocation3 + $0x20] sm:$0xff] %v334
        %369 = vst [vmem:[#allocation3 + $0x28] sm:$0xff] %v339
        %370 = vst [vmem:[#allocation3 + $0x30] sm:$0xff] %v344
        %371 = vst [vmem:[#allocation3 + $0x38] sm:$0xff] %v349
      $region36: #{tpu_custom_call.1} parent=27 // pred_fallthru
        _
      %p372 = scmp.gt.s32.totalorder %s20, 0
      // Predicated region
      $region37: #{tpu_custom_call.1} parent=27 // pred_check
        %p373 = pneg %p372
      $region38: #{tpu_custom_call.1} parent=27 // pred_check_branch
        %375 = sbr.rel (%p373) target = $region40
      $region39: #{tpu_custom_call.1} parent=27 // pred_region
        %v376 = vld [vmem:[#allocation3] sm:$0xff]
        %v377 = vld [vmem:[#allocation3 + $0x8] sm:$0xff]
        %v378 = vld [vmem:[#allocation3 + $0x10] sm:$0xff]
        %v379 = vld [vmem:[#allocation3 + $0x18] sm:$0xff]
        %v380 = vld [vmem:[#allocation3 + $0x20] sm:$0xff]
        %v381 = vld [vmem:[#allocation3 + $0x28] sm:$0xff]
        %v382 = vld [vmem:[#allocation3 + $0x30] sm:$0xff]
        %v383 = vld [vmem:[#allocation3 + $0x38] sm:$0xff]
        %v384 = vmin.f32 %v376, %v314
        %v385 = vmin.f32 %v377, %v319
        %v386 = vmin.f32 %v378, %v324
        %v387 = vmin.f32 %v379, %v329
        %v388 = vmin.f32 %v380, %v334
        %v389 = vmin.f32 %v381, %v339
        %v390 = vmin.f32 %v382, %v344
        %v391 = vmin.f32 %v383, %v349
        %392 = vst [vmem:[#allocation3] sm:$0xff] %v384
        %393 = vst [vmem:[#allocation3 + $0x8] sm:$0xff] %v385
        %394 = vst [vmem:[#allocation3 + $0x10] sm:$0xff] %v386
        %395 = vst [vmem:[#allocation3 + $0x18] sm:$0xff] %v387
        %396 = vst [vmem:[#allocation3 + $0x20] sm:$0xff] %v388
        %397 = vst [vmem:[#allocation3 + $0x28] sm:$0xff] %v389
        %398 = vst [vmem:[#allocation3 + $0x30] sm:$0xff] %v390
        %399 = vst [vmem:[#allocation3 + $0x38] sm:$0xff] %v391
      $region40: #{tpu_custom_call.1} parent=27 // pred_fallthru
        _
      %400 = vst [vmem:[%s212] sm:$0xff] %v359
      %p401 = pnand %p204, %p360
      %p402 = pneg %p401
      // Predicated region
      $region41: #{tpu_custom_call.1} parent=27 // pred_check
        _
      $region42: #{tpu_custom_call.1} parent=27 // pred_check_branch
        %404 = sbr.rel (%p401) target = $region44
      $region43: #{tpu_custom_call.1} parent=27 // pred_region
        %vm405 = vcmask 0
        %406 = vst.msk [vmem:[#allocation4] sm:$0x1] %vm405, -inf
      $region44: #{tpu_custom_call.1} parent=27 // pred_fallthru
        _
      // Predicated region
      $region45: #{tpu_custom_call.1} parent=27 // pred_check
        %p407 = pneg %p204
      $region46: #{tpu_custom_call.1} parent=27 // pred_check_branch
        %409 = sbr.rel (%p407) target = $region48
      $region47: #{tpu_custom_call.1} parent=27 // pred_region
        %v410 = vrot.slane %v359, 4
        %v411 = vmin.f32 %v359, %v410
        %v412 = vrot.slane %v411, 2
        %v413 = vmin.f32 %v411, %v412
        %v414 = vrot.slane %v413, 1
        %v415 = vmin.f32 %v413, %v414
        %s416 = smul.u32 %s20, 128
        %v417 = vlaneseq
        %v418 = vand.u32 %v417, 127
        %v419 = vstv %s416
        %v420 = vadd.s32 %v419, %v418
        %vm421 = vcmp.lt.s32.totalorder %v420, 8
        %v422 = vsel %vm421, %v415, -inf
        %v423 = vld [vmem:[#allocation4] sm:$0x1]
        %424 = vmax.xlane.f32.xlu0 %v422
        %v425 = vpop.xlane.xlu0 %424
        %v426 = vmax.f32 %v423, %v425
        %vm427 = vcmask 0
        %428 = vst.msk [vmem:[#allocation4] sm:$0x1] %vm427, %v426
      $region48: #{tpu_custom_call.1} parent=27 // pred_fallthru
        _
      // Predicated region
      $region49: #{tpu_custom_call.1} parent=27 // pred_check
        _
      $region50: #{tpu_custom_call.1} parent=27 // pred_check_branch
        %430 = sbr.rel (%p401) target = $region52
      $region51: #{tpu_custom_call.1} parent=27 // pred_region
        %vm431 = vcmask 0
        %432 = vst.msk [vmem:[#allocation5] sm:$0x1] %vm431, -inf
      $region52: #{tpu_custom_call.1} parent=27 // pred_fallthru
        _
      // Predicated region
      $region53: #{tpu_custom_call.1} parent=27 // pred_check
        %p433 = pneg %p360
      $region54: #{tpu_custom_call.1} parent=27 // pred_check_branch
        %435 = sbr.rel (%p433) target = $region56
      $region55: #{tpu_custom_call.1} parent=27 // pred_region
        %v436 = vld [vmem:[#allocation3] sm:$0xff]
        %v437 = vld [vmem:[#allocation3 + $0x8] sm:$0xff]
        %v438 = vld [vmem:[#allocation3 + $0x10] sm:$0xff]
        %v439 = vld [vmem:[#allocation3 + $0x18] sm:$0xff]
        %v440 = vld [vmem:[#allocation3 + $0x20] sm:$0xff]
        %v441 = vld [vmem:[#allocation3 + $0x28] sm:$0xff]
        %v442 = vld [vmem:[#allocation3 + $0x30] sm:$0xff]
        %v443 = vld [vmem:[#allocation3 + $0x38] sm:$0xff]
        %444 = vmin.xlane.f32.xlu0 %v436
        %v445 = vpop.xlane.xlu0 %444
        %446 = vmin.xlane.f32.xlu0 %v437
        %v447 = vpop.xlane.xlu0 %446
        %448 = vmin.xlane.f32.xlu0 %v438
        %v449 = vpop.xlane.xlu0 %448
        %450 = vmin.xlane.f32.xlu0 %v439
        %v451 = vpop.xlane.xlu0 %450
        %452 = vmin.xlane.f32.xlu0 %v440
        %v453 = vpop.xlane.xlu0 %452
        %454 = vmin.xlane.f32.xlu0 %v441
        %v455 = vpop.xlane.xlu0 %454
        %456 = vmin.xlane.f32.xlu0 %v442
        %v457 = vpop.xlane.xlu0 %456
        %458 = vmin.xlane.f32.xlu0 %v443
        %v459 = vpop.xlane.xlu0 %458
        %s460 = smul.u32 %s19, 64
        %v461 = vlaneseq
        %v462 = vshrl.u32 %v461, 7
        %v463 = vadd.s32 %v462, 8
        %v464 = vadd.s32 %v462, 16
        %v465 = vadd.s32 %v462, 24
        %v466 = vadd.s32 %v462, 32
        %v467 = vadd.s32 %v462, 40
        %v468 = vadd.s32 %v462, 48
        %v469 = vadd.s32 %v462, 56
        %v470 = vstv %s460
        %v471 = vadd.s32 %v470, %v462
        %v472 = vadd.s32 %v470, %v463
        %v473 = vadd.s32 %v470, %v464
        %v474 = vadd.s32 %v470, %v465
        %v475 = vadd.s32 %v470, %v466
        %v476 = vadd.s32 %v470, %v467
        %v477 = vadd.s32 %v470, %v468
        %v478 = vadd.s32 %v470, %v469
        %vm479 = vcmp.lt.s32.totalorder %v471, 16
        %vm480 = vcmp.lt.s32.totalorder %v472, 16
        %vm481 = vcmp.lt.s32.totalorder %v473, 16
        %vm482 = vcmp.lt.s32.totalorder %v474, 16
        %vm483 = vcmp.lt.s32.totalorder %v475, 16
        %vm484 = vcmp.lt.s32.totalorder %v476, 16
        %vm485 = vcmp.lt.s32.totalorder %v477, 16
        %vm486 = vcmp.lt.s32.totalorder %v478, 16
        %v487 = vsel %vm479, %v445, -inf
        %v488 = vsel %vm480, %v447, -inf
        %v489 = vsel %vm481, %v449, -inf
        %v490 = vsel %vm482, %v451, -inf
        %v491 = vsel %vm483, %v453, -inf
        %v492 = vsel %vm484, %v455, -inf
        %v493 = vsel %vm485, %v457, -inf
        %v494 = vsel %vm486, %v459, -inf
        %v495 = vld [vmem:[#allocation5] sm:$0x1]
        %v496 = vmax.f32 %v487, %v491
        %v497 = vmax.f32 %v488, %v492
        %v498 = vmax.f32 %v489, %v493
        %v499 = vmax.f32 %v490, %v494
        %v500 = vmax.f32 %v496, %v497
        %v501 = vmax.f32 %v498, %v499
        %v502 = vmax.f32 %v500, %v501
        %v503 = vrot.slane %v502, 4
        %v504 = vmax.f32 %v502, %v503
        %v505 = vrot.slane %v504, 2
        %v506 = vmax.f32 %v504, %v505
        %v507 = vrot.slane %v506, 1
        %v508 = vmax.f32 %v506, %v507
        %v509 = vmax.f32 %v495, %v508
        %vm510 = vcmask 0
        %511 = vst.msk [vmem:[#allocation5] sm:$0x1] %vm510, %v509
      $region56: #{tpu_custom_call.1} parent=27 // pred_fallthru
        _
      // Predicated region
      $region57: #{tpu_custom_call.1} parent=27 // pred_check
        _
      $region58: #{tpu_custom_call.1} parent=27 // pred_check_branch
        %513 = sbr.rel (%p401) target = $region60
      $region59: #{tpu_custom_call.1} parent=27 // pred_region
        %v514 = vld [vmem:[#allocation4] sm:$0x1]
        %v515 = vld [vmem:[#allocation5] sm:$0x1]
        %v516 = vadd.f32 %v514, %v515
        %v517 = vmul.f32 %v516, 0.5
        %vm518 = vcmask 0
        %519 = vst.msk [vmem:[%s202] sm:$0x1] %vm518, %v517
      $region60: #{tpu_custom_call.1} parent=27 // pred_fallthru
        _
      %p520 = scmp.lt.s32.totalorder %s18, 1
      %s521 = scalar_select %p520, %s18, 1
      %s522 = scalar_lea.vmem %s2, %s521
      // Predicated region
      $region61: #{tpu_custom_call.1} parent=27 // pred_check
        %p523 = pneg %p106
      $region62: #{tpu_custom_call.1} parent=27 // pred_check_branch
        %525 = sbr.rel (%p523) target = $region64
      $region63: #{tpu_custom_call.1} parent=27 // pred_region
        _
      $region64: #{tpu_custom_call.1} parent=27 // pred_fallthru
        _
    $region28: #{tpu_custom_call.1} parent=5 // pred_fallthru
      _
    %p526 = scmp.le.s32.totalorder 2, %s8
    // Predicated region
    $region65: #{tpu_custom_call.1} parent=5 // pred_check
      %p527 = pneg %p526
    $region66: #{tpu_custom_call.1} parent=5 // pred_check_branch
      %529 = sbr.rel (%p527) target = $region68
    $region67: #{tpu_custom_call.1} parent=5 // pred_region
      %s530 = ssub.s32 %s8, 2
      // Predicated region
      $region69: #{tpu_custom_call.1} parent=67 // pred_check
        %p531 = pneg %p112
      $region70: #{tpu_custom_call.1} parent=67 // pred_check_branch
        %533 = sbr.rel (%p531) target = $region72
      $region71: #{tpu_custom_call.1} parent=67 // pred_region
        %p534 = scmp.lt.s32.totalorder %s21, 1
        %s535 = scalar_select %p534, %s21, 1
        %s536 = scalar_lea.vmem %s2, %s535
      $region72: #{tpu_custom_call.1} parent=67 // pred_fallthru
        _
    $region68: #{tpu_custom_call.1} parent=5 // pred_fallthru
      _
  $region6: #{tpu_custom_call.1} parent=0 // loop_footer
    %s12 = sadd.s32 1, %s8
  $region7: #{tpu_custom_call.1} parent=0 // loop_footer_branch
    %7 = sbr.rel target = $region3
  $region8: #{tpu_custom_call.1} parent=0 // loop_exit
    _

</llo_original>
